<compile_context>
chip_gen: v7x
topology: tpu7x:2x2x1
jax: 0.10.0
libtpu: 0.0.40
codegen_flags: <defaults>
</compile_context>

<pallas_src>
import functools

import jax
import jax.numpy as jnp
from jax.experimental import pallas as pl
from jax.experimental.pallas import tpu as pltpu

_NEG = -1e30  # finite "masked" logit: keeps running-max / exp NaN-free for edgeless rows


def _round_up(x, m):
    return ((x + m - 1) // m) * m


def _leaky_relu(x, alpha):
    return jnp.where(x > 0, x, alpha * x)


def _elu(x):
    return jnp.where(x > 0, x, jnp.exp(x) - 1.0)


# ---------------------------------------------------------------------------
# K1: node-feature transform  hx = x @ [W_0..W_{H-1} | W_k a_k[:D] | W_k a_k[D:]]
# ---------------------------------------------------------------------------
def _transform_kernel(x_ref, w_ref, hx_ref):
    hx_ref[...] = jnp.dot(x_ref[...], w_ref[...], preferred_element_type=jnp.float32)


# ---------------------------------------------------------------------------
# K2: hidden layer, all heads, flash-style accumulation over key (column) tiles
# ---------------------------------------------------------------------------
def _hidden_attn_kernel(hx_row_ref, hx_col_ref, adj_ref, hcat_ref, m_sc, acc_sc,
                        *, alpha, nheads, nhid):
    col = pl.program_id(1)
    hd = nheads * nhid

    @pl.when(col == 0)
    def _init():
        m_sc[...] = jnp.full_like(m_sc, _NEG)
        acc_sc[...] = jnp.zeros_like(acc_sc)

    mask = adj_ref[...] != 0                                    # int8 tile -> bool, no upcast
    f1 = hx_row_ref[:, hd:hd + nheads]                          # (tm, H)  query-side logits
    f2t = hx_col_ref[:, hd + nheads:hd + 2 * nheads].T          # (H, tk)  one transpose, all heads
    h_col = hx_col_ref[:, :hd].astype(jnp.bfloat16)             # (tk, H*D) value tiles (MXU bf16)
    ones = jnp.ones((h_col.shape[0], 1), jnp.bfloat16)          # rowsum folded into the matmul

    for k in range(nheads):                                     # static unroll: nheads is small
        s = -_leaky_relu(f1[:, k:k + 1] + f2t[k:k + 1, :], alpha)     # score; e = exp(score)
        m_old = m_sc[:, k:k + 1]
        m_new = jnp.maximum(m_old, jnp.max(jnp.where(mask, s, _NEG), axis=1, keepdims=True))
        p = jnp.where(mask, jnp.exp(s - m_new), 0.0)             # stabilized edge weights
        kv = jnp.concatenate([h_col[:, k * nhid:(k + 1) * nhid], ones], axis=1)   # (tk, D+1)
        upd = jnp.dot(p.astype(jnp.bfloat16), kv, preferred_element_type=jnp.float32)
        acc_sc[k] = jnp.exp(m_old - m_new) * acc_sc[k] + upd     # [:, :D]=agg, [:, D]=rowsum
        m_sc[:, k:k + 1] = m_new

    @pl.when(col == pl.num_programs(1) - 1)
    def _finalize():
        outs = []
        for k in range(nheads):
            acc = acc_sc[k]                                      # (tm, D+1)
            l = acc[:, nhid:nhid + 1]
            inv = jnp.where(l > 0.0, pl.reciprocal(l, approx=True), 0.0)
            outs.append(_elu(acc[:, :nhid] * inv))               # concat=True head output
        h_cat = jnp.concatenate(outs, axis=1)                    # (tm, H*D)
        pad = hcat_ref.shape[1] - h_cat.shape[1]
        if pad:                                                  # lane-dense store
            h_cat = jnp.concatenate(
                [h_cat, jnp.zeros((h_cat.shape[0], pad), h_cat.dtype)], axis=1)
        hcat_ref[...] = h_cat.astype(hcat_ref.dtype)


# ---------------------------------------------------------------------------
# K3: output layer attention + ELU + log_softmax
# ---------------------------------------------------------------------------
def _out_attn_kernel(hcat_row_ref, hcat_col_ref, wo_ref, adj_ref, out_ref,
                     m_sc, acc_sc, f1_sc, *, alpha, nclass):
    col = pl.program_id(1)

    @pl.when(col == 0)
    def _init():
        m_sc[...] = jnp.full_like(m_sc, _NEG)
        acc_sc[...] = jnp.zeros_like(acc_sc)
        ho_row = jnp.dot(hcat_row_ref[...], wo_ref[...], preferred_element_type=jnp.float32)
        f1_sc[...] = ho_row[:, nclass:nclass + 1]                # query-side logit column

    mask = adj_ref[...] != 0
    ho_col = jnp.dot(hcat_col_ref[...], wo_ref[...], preferred_element_type=jnp.float32)  # (tk, C+2)
    f2t = ho_col[:, nclass + 1:nclass + 2].T                     # (1, tk)
    s = -_leaky_relu(f1_sc[...] + f2t, alpha)
    m_old = m_sc[...]
    m_new = jnp.maximum(m_old, jnp.max(jnp.where(mask, s, _NEG), axis=1, keepdims=True))
    p = jnp.where(mask, jnp.exp(s - m_new), 0.0)
    kv = jnp.concatenate([ho_col[:, :nclass].astype(jnp.bfloat16),
                          jnp.ones((ho_col.shape[0], 1), jnp.bfloat16)], axis=1)   # (tk, C+1)
    upd = jnp.dot(p.astype(jnp.bfloat16), kv, preferred_element_type=jnp.float32)
    acc_sc[...] = jnp.exp(m_old - m_new) * acc_sc[...] + upd
    m_sc[...] = m_new

    @pl.when(col == pl.num_programs(1) - 1)
    def _finalize():
        acc = acc_sc[...]
        l = acc[:, nclass:nclass + 1]
        inv = jnp.where(l > 0.0, pl.reciprocal(l, approx=True), 0.0)
        z = _elu(acc[:, :nclass] * inv)                          # F.elu(out_att(x, adj))
        mz = jnp.max(z, axis=1, keepdims=True)                   # log_softmax(dim=1)
        logp = z - (mz + jnp.log(jnp.sum(jnp.exp(z - mz), axis=1, keepdims=True)))
        pad = out_ref.shape[1] - nclass
        if pad:                                                  # lane-dense store, sliced in wrapper
            logp = jnp.concatenate(
                [logp, jnp.zeros((logp.shape[0], pad), jnp.float32)], axis=1)
        out_ref[...] = logp.astype(out_ref.dtype)


# ---------------------------------------------------------------------------
# Host-side wrapper
# ---------------------------------------------------------------------------
def _augmented_weights(Ws, As, W_out, a_out):
    """Fold attention vectors into the weight matmuls; bf16 for the MXU fast path."""
    nheads, nhid, nclass = len(Ws), Ws[0].shape[1], W_out.shape[1]
    wh_aug = jnp.concatenate(
        [jnp.concatenate(Ws, axis=1),                                                    # (F, H*D)
         jnp.concatenate([Ws[k] @ As[k][:, :nhid].T for k in range(nheads)], axis=1),    # f1 cols
         jnp.concatenate([Ws[k] @ As[k][:, nhid:].T for k in range(nheads)], axis=1)],   # f2 cols
        axis=1).astype(jnp.bfloat16)
    wo_aug = jnp.concatenate(
        [W_out, W_out @ a_out[:, :nclass].T, W_out @ a_out[:, nclass:].T],
        axis=1).astype(jnp.bfloat16)                                                     # (H*D, C+2)
    return wh_aug, wo_aug


def spgat_forward(x, adj, Ws, As, W_out, a_out, *, alpha):
    """Eval-mode SpGAT forward (dropout = identity) as three tiled Pallas calls."""
    N, nfeat = x.shape
    nheads, nhid, nclass = len(Ws), Ws[0].shape[1], W_out.shape[1]
    hd = nheads * nhid

    # ---- per-generation tiling: v7x has 64 MiB VMEM per TC, v5e/v6e have 128 MiB ----
    try:
        vmem_cap = pltpu.get_tpu_info().vmem_capacity_bytes
    except Exception:
        vmem_cap = 64 * 1024 * 1024
    big_vmem = vmem_cap >= 96 * 1024 * 1024
    tile_target = 512 if big_vmem else 256
    vmem_limit = (96 if big_vmem else 48) * 1024 * 1024

    tile = min(tile_target, _round_up(N, 128))
    n_pad = _round_up(N, tile)
    n_tiles = n_pad // tile

    wh_aug, wo_aug = _augmented_weights(Ws, As, W_out, a_out)
    w_cols = _round_up(hd + 2 * nheads, 128)
    wh_p = jnp.pad(wh_aug, ((0, 0), (0, w_cols - wh_aug.shape[1])))
    dcat_p = _round_up(hd, 128)
    wo_p = jnp.pad(wo_aug, ((0, dcat_p - hd), (0, 0)))
    out_lanes = _round_up(max(nclass, 1), 128)

    x_p = jnp.pad(x, ((0, n_pad - N), (0, 0))).astype(jnp.bfloat16)
    adj_i8 = jnp.pad((adj != 0).astype(jnp.int8), ((0, n_pad - N), (0, n_pad - N)))

    # ---- K1: hx = x @ wh_aug (row tiled) ----
    hx = pl.pallas_call(
        _transform_kernel,
        out_shape=jax.ShapeDtypeStruct((n_pad, w_cols), jnp.float32),
        grid=(n_tiles,),
        in_specs=[pl.BlockSpec((tile, nfeat), lambda i: (i, 0)),
                  pl.BlockSpec((nfeat, w_cols), lambda i: (0, 0))],
        out_specs=pl.BlockSpec((tile, w_cols), lambda i: (i, 0)),
        compiler_params=pltpu.CompilerParams(
            dimension_semantics=("parallel",), vmem_limit_bytes=vmem_limit),
    )(x_p, wh_p)

    # ---- K2: hidden-layer attention for all heads ----
    hidden = functools.partial(_hidden_attn_kernel, alpha=alpha, nheads=nheads, nhid=nhid)
    h_cat = pl.pallas_call(
        hidden,
        out_shape=jax.ShapeDtypeStruct((n_pad, dcat_p), jnp.bfloat16),
        grid=(n_tiles, n_tiles),
        in_specs=[pl.BlockSpec((tile, w_cols), lambda i, j: (i, 0)),   # f1 (query rows)
                  pl.BlockSpec((tile, w_cols), lambda i, j: (j, 0)),   # h / f2 (key cols)
                  pl.BlockSpec((tile, tile), lambda i, j: (i, j))],    # adj tile (int8)
        out_specs=pl.BlockSpec((tile, dcat_p), lambda i, j: (i, 0)),
        scratch_shapes=[pltpu.VMEM((tile, nheads), jnp.float32),             # running max / head
                        pltpu.VMEM((nheads, tile, nhid + 1), jnp.float32)],  # [agg | rowsum] / head
        compiler_params=pltpu.CompilerParams(
            dimension_semantics=("parallel", "arbitrary"), vmem_limit_bytes=vmem_limit),
    )(hx, hx, adj_i8)

    # ---- K3: output-layer attention + ELU + log_softmax ----
    out_k = functools.partial(_out_attn_kernel, alpha=alpha, nclass=nclass)
    out_p = pl.pallas_call(
        out_k,
        out_shape=jax.ShapeDtypeStruct((n_pad, out_lanes), jnp.float32),
        grid=(n_tiles, n_tiles),
        in_specs=[pl.BlockSpec((tile, dcat_p), lambda i, j: (i, 0)),    # h_cat query rows
                  pl.BlockSpec((tile, dcat_p), lambda i, j: (j, 0)),    # h_cat key cols
                  pl.BlockSpec((dcat_p, nclass + 2), lambda i, j: (0, 0)),
                  pl.BlockSpec((tile, tile), lambda i, j: (i, j))],
        out_specs=pl.BlockSpec((tile, out_lanes), lambda i, j: (i, 0)),
        scratch_shapes=[pltpu.VMEM((tile, 1), jnp.float32),             # running max
                        pltpu.VMEM((tile, nclass + 1), jnp.float32),    # [agg | rowsum]
                        pltpu.VMEM((tile, 1), jnp.float32)],            # f1 (query logits)
        compiler_params=pltpu.CompilerParams(
            dimension_semantics=("parallel", "arbitrary"), vmem_limit_bytes=vmem_limit),
    )(h_cat, h_cat, wo_p, adj_i8)

    return out_p[:N, :nclass]


def _reference(x, adj, wh_aug, wo_aug, *, nheads, nhid, nclass, alpha):
    """Pure-JAX f32 reference using the same bf16-rounded fused weights as the kernels."""
    hd = nheads * nhid
    mask = adj != 0
    hx = x.astype(jnp.bfloat16).astype(jnp.float32) @ wh_aug.astype(jnp.float32)
    h_all, f1, f2 = hx[:, :hd], hx[:, hd:hd + nheads], hx[:, hd + nheads:hd + 2 * nheads]

    def attend(hv, f1c, f2c):
        s = f1c + f2c.T
        e = jnp.where(mask, jnp.exp(-jnp.where(s > 0, s, alpha * s)), 0.0)
        rs = jnp.sum(e, axis=1, keepdims=True)
        return (e @ hv) / jnp.where(rs > 0, rs, 1.0)

    heads = []
    for k in range(nheads):
        hp = attend(h_all[:, k * nhid:(k + 1) * nhid], f1[:, k:k + 1], f2[:, k:k + 1])
        heads.append(jnp.where(hp > 0, hp, jnp.exp(hp) - 1.0))
    h_cat = jnp.concatenate(heads, axis=1)
    ho = h_cat @ wo_aug.astype(jnp.float32)
    hp = attend(ho[:, :nclass], ho[:, nclass:nclass + 1], ho[:, nclass + 1:nclass + 2])
    z = jnp.where(hp > 0, hp, jnp.exp(hp) - 1.0)
    return jax.nn.log_softmax(z, axis=1)


if __name__ == "__main__":
    N, nfeat, nhid, nclass, nheads = 32, 16, 8, 4, 4
    alpha = 0.2                                                # dropout=0.6 unused (eval mode)

    key = jax.random.PRNGKey(0)
    keys = jax.random.split(key, 3 + 2 * nheads)

    x = jax.random.normal(keys[0], (N, nfeat), dtype=jnp.float32)
    adj = (jax.random.uniform(keys[1], (N, N)) < 0.3).astype(jnp.float32)
    adj = jnp.maximum(adj, jnp.eye(N, dtype=jnp.float32))      # self loops: every row has an edge

    def xavier_normal(k, shape, gain=1.414):
        fan_in, fan_out = shape
        std = gain * (2.0 / (fan_in + fan_out)) ** 0.5
        return std * jax.random.normal(k, shape, dtype=jnp.float32)

    Ws = [xavier_normal(keys[2 + i], (nfeat, nhid)) for i in range(nheads)]
    As = [xavier_normal(keys[2 + nheads + i], (1, 2 * nhid)) for i in range(nheads)]
    W_out = xavier_normal(keys[2 + 2 * nheads], (nhid * nheads, nclass))
    a_out = xavier_normal(jax.random.fold_in(key, 99), (1, 2 * nclass))

    out = spgat_forward(x, adj, Ws, As, W_out, a_out, alpha=alpha)
    jax.block_until_ready(out)

    assert out.shape == (N, nclass)
    assert bool(jnp.all(jnp.isfinite(out)))

    wh_aug, wo_aug = _augmented_weights(Ws, As, W_out, a_out)
    ref = _reference(x, adj, wh_aug, wo_aug,
                     nheads=nheads, nhid=nhid, nclass=nclass, alpha=alpha)
    assert float(jnp.max(jnp.abs(out - ref))) < 0.25           # bf16 MXU + approx-reciprocal tol
    print("KERNEL_OK")
</pallas_src>

<mosaic_0001>
module attributes {stable_mosaic.version = 11 : i64} {
  func.func @_transform_kernel(%arg0: i32, %arg1: memref<128x16xbf16, #tpu.memory_space<vmem>>, %arg2: memref<16x128xbf16, #tpu.memory_space<vmem>>, %arg3: memref<128x128xf32, #tpu.memory_space<vmem>>) attributes {dimension_semantics = [#tpu.dimension_semantics<parallel>], iteration_bounds = array<i64: 1>, scalar_prefetch = 0 : i64, scratch_operands = 0 : i64, tpu.core_type = #tpu.core_type<tc>, window_params = [{transform_indices = @transform_0, window_bounds = array<i64: 128, 16>}, {pipeline_mode = #tpu.pipeline_mode<synchronous>, transform_indices = @transform_1, window_bounds = array<i64: 16, 128>}, {transform_indices = @transform_2, window_bounds = array<i64: 128, 128>}]} {
    %c0 = arith.constant 0 : index
    %c0_0 = arith.constant 0 : index
    %0 = vector.load %arg1[%c0, %c0_0] : memref<128x16xbf16, #tpu.memory_space<vmem>>, vector<128x16xbf16>
    %c0_1 = arith.constant 0 : index
    %c0_2 = arith.constant 0 : index
    %1 = vector.load %arg2[%c0_1, %c0_2] : memref<16x128xbf16, #tpu.memory_space<vmem>>, vector<16x128xbf16>
    %cst = arith.constant dense<0.000000e+00> : vector<128x128xf32>
    %2 = tpu.matmul %0, %1, %cst {dimension_numbers = #tpu.dot_dimension_numbers<[1], [0], [0], [1], [0, 0, 1, 1], [], []>} : vector<128x16xbf16>, vector<16x128xbf16>, vector<128x128xf32> -> vector<128x128xf32>
    %c0_3 = arith.constant 0 : index
    %c0_4 = arith.constant 0 : index
    %3 = vector.load %arg3[%c0_3, %c0_4] : memref<128x128xf32, #tpu.memory_space<vmem>>, vector<128x128xf32>
    tpu.vector_store %arg3[%c0_3, %c0_4], %2 {strides = array<i32>} : memref<128x128xf32, #tpu.memory_space<vmem>>, vector<128x128xf32>,
    return
  }
  func.func @transform_0(%arg0: i32) -> (i32, i32) {
    %c0_i32 = arith.constant 0 : i32
    %c0_i32_0 = arith.constant 0 : i32
    return %arg0, %c0_i32 : i32, i32
  }
  func.func @transform_1(%arg0: i32) -> (i32, i32) {
    %c0_i32 = arith.constant 0 : i32
    %c0_i32_0 = arith.constant 0 : i32
    %c0_i32_1 = arith.constant 0 : i32
    return %c0_i32, %c0_i32_0 : i32, i32
  }
  func.func @transform_2(%arg0: i32) -> (i32, i32) {
    %c0_i32 = arith.constant 0 : i32
    %c0_i32_0 = arith.constant 0 : i32
    return %arg0, %c0_i32 : i32, i32
  }
}

</mosaic_0001>

<llo_original>
// kernel: tpu_custom_call.1
$region0: #{tpu_custom_call.1}
  #allocation0 [shape = 'u32[]', space=smem, size = 0x4, offset = 0x4, fixed_abs, tag = 'smem constant byte address 0x4 - core index']
  #allocation1 [shape = 'u32[144,128]{1,0:T(1,128)}', space=vmem, size = 0x12000, scoped, tag = 'internal scratch']
  %s0 = inlined_call_operand.vmem [shape: bf16[128,16], index: 0, kind: input, shape index: {}]
  %s1 = inlined_call_operand.vmem [shape: bf16[16,128], index: 1, kind: input, shape index: {}]
  %s2 = inlined_call_operand.hbm [shape: f32[128,128], index: 2, kind: output, shape index: {}]
  %s3 = sld [smem:[#allocation0]]
  $region18: #{tpu_custom_call.1} parent=0
    _
  %s5 = ssub.s32 1, %s3
  %s6 = scalar_select 0, %s5, %s3
  $region1: #{tpu_custom_call.1} parent=0
    #allocation2 [shape = 'u8[65536]{0}', space=vmem, size = 0x10000, scoped, tag = 'output window, operand 0, single buffered']
    #allocation3 [shape = 's32[1]{0}', space=sflag, size = 0x4, scoped, tag = 'scoped memory for tpu_custom_call.1']
    %7 = vsyncpa [#allocation3], 0
    // Predicated region
    $region2: #{tpu_custom_call.1} parent=1 // pred_check
      _
    $region3: #{tpu_custom_call.1} parent=1 // pred_check_branch
      %9 = sbr.rel (0) target = $region5
    $region4: #{tpu_custom_call.1} parent=1 // pred_region
      _
    $region5: #{tpu_custom_call.1} parent=1 // pred_fallthru
      _
    // Predicated region
    $region6: #{tpu_custom_call.1} parent=1 // pred_check
      _
    $region7: #{tpu_custom_call.1} parent=1 // pred_check_branch
      %11 = sbr.rel (0) target = $region9
    $region8: #{tpu_custom_call.1} parent=1 // pred_region
      _
    $region9: #{tpu_custom_call.1} parent=1 // pred_fallthru
      _
    %v13 = vld [vmem:[%s0] sm:$0xf]
    %v14 = vld [vmem:[%s0 + $0x4] sm:$0xf]
    %v15 = vld [vmem:[%s0 + $0x8] sm:$0xf]
    %v16 = vld [vmem:[%s0 + $0xc] sm:$0xf]
    %v17 = vld [vmem:[%s0 + $0x10] sm:$0xf]
    %v18 = vld [vmem:[%s0 + $0x14] sm:$0xf]
    %v19 = vld [vmem:[%s0 + $0x18] sm:$0xf]
    %v20 = vld [vmem:[%s0 + $0x1c] sm:$0xf]
    %v21 = vld [vmem:[%s0 + $0x20] sm:$0xf]
    %v22 = vld [vmem:[%s0 + $0x24] sm:$0xf]
    %v23 = vld [vmem:[%s0 + $0x28] sm:$0xf]
    %v24 = vld [vmem:[%s0 + $0x2c] sm:$0xf]
    %v25 = vld [vmem:[%s0 + $0x30] sm:$0xf]
    %v26 = vld [vmem:[%s0 + $0x34] sm:$0xf]
    %v27 = vld [vmem:[%s0 + $0x38] sm:$0xf]
    %v28 = vld [vmem:[%s0 + $0x3c] sm:$0xf]
    %v29 = vld [vmem:[%s1] sm:$0xf]
    %v30 = vld [vmem:[%s1 + $0x4] sm:$0xf]
    %v47 = vunpack.c.l.b16 %v13
    %v48 = vunpack.c.l.b16 %v14
    %v49 = vunpack.c.l.b16 %v15
    %v50 = vunpack.c.l.b16 %v16
    %v51 = vunpack.c.l.b16 %v17
    %v52 = vunpack.c.l.b16 %v18
    %v53 = vunpack.c.l.b16 %v19
    %v54 = vunpack.c.l.b16 %v20
    %v55 = vunpack.c.l.b16 %v21
    %v56 = vunpack.c.l.b16 %v22
    %v57 = vunpack.c.l.b16 %v23
    %v58 = vunpack.c.l.b16 %v24
    %v59 = vunpack.c.l.b16 %v25
    %v60 = vunpack.c.l.b16 %v26
    %v61 = vunpack.c.l.b16 %v27
    %v62 = vunpack.c.l.b16 %v28
    %v63 = vpack.c.b16 %v48, %v47
    %v64 = vpack.c.b16 %v50, %v49
    %v65 = vpack.c.b16 %v52, %v51
    %v66 = vpack.c.b16 %v54, %v53
    %v67 = vpack.c.b16 %v56, %v55
    %v68 = vpack.c.b16 %v58, %v57
    %v69 = vpack.c.b16 %v60, %v59
    %v70 = vpack.c.b16 %v62, %v61
    %v73 = vunpack.c.l.b16 %v29
    %v74 = vunpack.c.l.b16 %v30
    %v75 = vpack.c.b16 %v74, %v73
    %vm77 = vcmask 130048
    %v79 = vsel %vm77, %v63, 0
    %v82 = vsel %vm77, %v64, 0
    %v85 = vsel %vm77, %v65, 0
    %v88 = vsel %vm77, %v66, 0
    %v91 = vsel %vm77, %v67, 0
    %v94 = vsel %vm77, %v68, 0
    %v97 = vsel %vm77, %v69, 0
    %v100 = vsel %vm77, %v70, 0
    %102 = vmatprep.subr.bf16.mxu0 0
    %103 = vmatpush1.bf16.msra.mxu0 %v75
    %104 = vmatprep.subr.bf16.mxu0 0
    %105 = vmatpush1.bf16.msra.mxu0 0
    %106 = vmatprep.subr.bf16.mxu0 0
    %107 = vmatpush1.bf16.msra.mxu0 0
    %108 = vmatprep.subr.bf16.mxu0 0
    %109 = vmatpush1.bf16.msra.mxu0 0
    %110 = vmatprep.subr.bf16.mxu0 0
    %111 = vmatpush1.bf16.msra.mxu0 0
    %112 = vmatprep.subr.bf16.mxu0 0
    %113 = vmatpush1.bf16.msra.mxu0 0
    %114 = vmatprep.subr.bf16.mxu0 0
    %115 = vmatpush1.bf16.msra.mxu0 0
    %116 = vmatprep.subr.bf16.mxu0 0
    %117 = vmatpush1.bf16.msra.mxu0 0
    %118 = vmatprep.subr.bf16.mxu0 0
    %119 = vmatpush1.bf16.msra.mxu0 0
    %120 = vmatprep.subr.bf16.mxu0 0
    %121 = vmatpush1.bf16.msra.mxu0 0
    %122 = vmatprep.subr.bf16.mxu0 0
    %123 = vmatpush1.bf16.msra.mxu0 0
    %124 = vmatprep.subr.bf16.mxu0 0
    %125 = vmatpush1.bf16.msra.mxu0 0
    %126 = vmatprep.subr.bf16.mxu0 0
    %127 = vmatpush1.bf16.msra.mxu0 0
    %128 = vmatprep.subr.bf16.mxu0 0
    %129 = vmatpush1.bf16.msra.mxu0 0
    %130 = vmatprep.subr.bf16.mxu0 0
    %131 = vmatpush1.bf16.msra.mxu0 0
    %132 = vmatprep.subr.bf16.mxu0 0
    %133 = vmatpush1.bf16.msra.mxu0 0
    %134 = vmatprep.mubr.bf16.mxu0 0
    %135 = vmatmul.mubr.bf16.gmra.mrb[0].mxu0 %v79
    %v136 = vpop.f32.mrb[0].mxu0
    %v137 = vadd.f32 0.0, %v136
    %v138 = vpop.f32.mrb[0].mxu0
    %v139 = vpop.f32.mrb[0].mxu0
    %v140 = vadd.f32 0.0, %v139
    %v141 = vpop.f32.mrb[0].mxu0
    %142 = vmatprep.mubr.bf16.mxu0 0
    %143 = vmatmul.mubr.bf16.gmra.mrb[0].mxu0 %v82
    %v144 = vpop.f32.mrb[0].mxu0
    %v145 = vadd.f32 0.0, %v144
    %v146 = vpop.f32.mrb[0].mxu0
    %v147 = vpop.f32.mrb[0].mxu0
    %v148 = vadd.f32 0.0, %v147
    %v149 = vpop.f32.mrb[0].mxu0
    %150 = vmatprep.mubr.bf16.mxu0 0
    %151 = vmatmul.mubr.bf16.gmra.mrb[0].mxu0 %v85
    %v152 = vpop.f32.mrb[0].mxu0
    %v153 = vadd.f32 0.0, %v152
    %v154 = vpop.f32.mrb[0].mxu0
    %v155 = vpop.f32.mrb[0].mxu0
    %v156 = vadd.f32 0.0, %v155
    %v157 = vpop.f32.mrb[0].mxu0
    %158 = vmatprep.mubr.bf16.mxu0 0
    %159 = vmatmul.mubr.bf16.gmra.mrb[0].mxu0 %v88
    %v160 = vpop.f32.mrb[0].mxu0
    %v161 = vadd.f32 0.0, %v160
    %v162 = vpop.f32.mrb[0].mxu0
    %v163 = vpop.f32.mrb[0].mxu0
    %v164 = vadd.f32 0.0, %v163
    %v165 = vpop.f32.mrb[0].mxu0
    %166 = vmatprep.mubr.bf16.mxu0 0
    %167 = vmatmul.mubr.bf16.gmra.mrb[0].mxu0 %v91
    %v168 = vpop.f32.mrb[0].mxu0
    %v169 = vadd.f32 0.0, %v168
    %v170 = vpop.f32.mrb[0].mxu0
    %v171 = vpop.f32.mrb[0].mxu0
    %v172 = vadd.f32 0.0, %v171
    %v173 = vpop.f32.mrb[0].mxu0
    %174 = vmatprep.mubr.bf16.mxu0 0
    %175 = vmatmul.mubr.bf16.gmra.mrb[0].mxu0 %v94
    %v176 = vpop.f32.mrb[0].mxu0
    %v177 = vadd.f32 0.0, %v176
    %v178 = vpop.f32.mrb[0].mxu0
    %v179 = vpop.f32.mrb[0].mxu0
    %v180 = vadd.f32 0.0, %v179
    %v181 = vpop.f32.mrb[0].mxu0
    %182 = vmatprep.mubr.bf16.mxu0 0
    %183 = vmatmul.mubr.bf16.gmra.mrb[0].mxu0 %v97
    %v184 = vpop.f32.mrb[0].mxu0
    %v185 = vadd.f32 0.0, %v184
    %v186 = vpop.f32.mrb[0].mxu0
    %v187 = vpop.f32.mrb[0].mxu0
    %v188 = vadd.f32 0.0, %v187
    %v189 = vpop.f32.mrb[0].mxu0
    %190 = vmatprep.mubr.bf16.mxu0 0
    %191 = vmatmul.mubr.bf16.gmra.mrb[0].mxu0 %v100
    %v192 = vpop.f32.mrb[0].mxu0
    %v193 = vadd.f32 0.0, %v192
    %v194 = vpop.f32.mrb[0].mxu0
    %v195 = vpop.f32.mrb[0].mxu0
    %v196 = vadd.f32 0.0, %v195
    %v197 = vpop.f32.mrb[0].mxu0
    %198 = vdwg.mxu0
    %199 = vst [vmem:[#allocation2] sm:$0xff] %v137
    %200 = vst [vmem:[#allocation2 + $0x8] sm:$0xff] %v140
    %201 = vst [vmem:[#allocation2 + $0x10] sm:$0xff] %v145
    %202 = vst [vmem:[#allocation2 + $0x18] sm:$0xff] %v148
    %203 = vst [vmem:[#allocation2 + $0x20] sm:$0xff] %v153
    %204 = vst [vmem:[#allocation2 + $0x28] sm:$0xff] %v156
    %205 = vst [vmem:[#allocation2 + $0x30] sm:$0xff] %v161
    %206 = vst [vmem:[#allocation2 + $0x38] sm:$0xff] %v164
    %207 = vst [vmem:[#allocation2 + $0x40] sm:$0xff] %v169
    %208 = vst [vmem:[#allocation2 + $0x48] sm:$0xff] %v172
    %209 = vst [vmem:[#allocation2 + $0x50] sm:$0xff] %v177
    %210 = vst [vmem:[#allocation2 + $0x58] sm:$0xff] %v180
    %211 = vst [vmem:[#allocation2 + $0x60] sm:$0xff] %v185
    %212 = vst [vmem:[#allocation2 + $0x68] sm:$0xff] %v188
    %213 = vst [vmem:[#allocation2 + $0x70] sm:$0xff] %v193
    %214 = vst [vmem:[#allocation2 + $0x78] sm:$0xff] %v196
    // Predicated region
    $region10: #{tpu_custom_call.1} parent=1 // pred_check
      _
    $region11: #{tpu_custom_call.1} parent=1 // pred_check_branch
      %216 = sbr.rel (0) target = $region13
    $region12: #{tpu_custom_call.1} parent=1 // pred_region
      %s218 = ssub.s32 2048, 2048
      %219 = vsyncadd [#allocation3], %s218
      %s220 = sshll.u32 [#allocation2], 4
      %s221 = int_to_ptr.vmem [resolvable:$true] %s220
      %226 = dma.vmem_to_hbm [thread:$0]  %s221, 2048, %s2, [#allocation3], 128, 128, 8
    $region13: #{tpu_custom_call.1} parent=1 // pred_fallthru
      _
    // Predicated region
    $region14: #{tpu_custom_call.1} parent=1 // pred_check
      _
    $region15: #{tpu_custom_call.1} parent=1 // pred_check_branch
      %228 = sbr.rel (0) target = $region17
    $region16: #{tpu_custom_call.1} parent=1 // pred_region
      %229 = dma.done [#allocation3], 2048
    $region17: #{tpu_custom_call.1} parent=1 // pred_fallthru
      _
    %230 = vsyncpa [#allocation3], 1

</llo_original>
